<compile_context>
chip_gen: v5e
topology: v5e:2x2
jax: 0.10.0
libtpu: 0.0.40
codegen_flags: <defaults>
</compile_context>

<pallas_src>
import jax
import jax.numpy as jnp
from jax import lax
from jax.experimental import pallas as pl
from jax.experimental.pallas import tpu as pltpu


def gru_kernel(x_ref, wih_ref, whh_ref, bi_ref, bnh_ref, fcw_ref, fcb_ref,
               out_ref, gi_ref):
    """Whole GRU forward in one invocation.

    x_ref   : (S*B, E)   time-major embeddings, flattened over (seq, batch)
    wih_ref : (E, 3H)    input->hidden weights, gate-concatenated (r|z|n) along lanes
    whh_ref : (H, 3H)    hidden->hidden weights, gate-concatenated (r|z|n)
    bi_ref  : (1, 3H)    [b_ir+b_hr | b_iz+b_hz | b_in] (pre-folded)
    bnh_ref : (1, H)     b_hn (kept separate: lives inside r * (h W_hn^T + b_hn))
    fcw_ref : (H, C)     classifier weight, transposed
    fcb_ref : (1, C)     classifier bias
    out_ref : (B, C)     prediction
    gi_ref  : (S*B, 3H)  VMEM scratch with all precomputed input projections
    """
    sb = x_ref.shape[0]
    hidden = whh_ref.shape[0]
    batch = out_ref.shape[0]
    seq_len = sb // batch

    # ---- Phase 1: single fused input-projection matmul for all timesteps & gates. ----
    gi_ref[...] = (jnp.dot(x_ref[...], wih_ref[...],
                           preferred_element_type=jnp.float32) + bi_ref[...])

    # Loop-invariant loads / broadcasts hoisted out of the recurrence.
    w_hh = whh_ref[...]                                           # (H, 3H)
    b_hn = jnp.broadcast_to(bnh_ref[...], (batch, hidden))        # hoisted: no per-step bcast

    # ---- Phase 2: sequential recurrence, hidden state carried in registers. ----
    def step(t, h):
        row = pl.multiple_of(t * batch, batch)
        gi = gi_ref[pl.ds(row, batch), :]                         # (B, 3H), biases folded
        # One MXU push per step instead of three; gate split is a static lane slice (XLU).
        gh = jnp.dot(h, w_hh, preferred_element_type=jnp.float32)  # (B, 3H)
        r = jax.nn.sigmoid(gi[:, :hidden] + gh[:, :hidden])
        z = jax.nn.sigmoid(gi[:, hidden:2 * hidden] + gh[:, hidden:2 * hidden])
        n = jnp.tanh(gi[:, 2 * hidden:] + r * (gh[:, 2 * hidden:] + b_hn))
        return (1.0 - z) * n + z * h

    h0 = jnp.zeros((batch, hidden), jnp.float32)
    # Full unroll only for short sequences; partial unroll keeps LLO visibility without
    # blowing up bundle count / i-cache for long, fully data-dependent recurrences.
    unroll = True if seq_len <= 32 else 8
    h_last = lax.fori_loop(0, seq_len, step, h0, unroll=unroll)

    # ---- Phase 3: fused classifier on the final hidden state. ----
    out_ref[...] = (jnp.dot(h_last, fcw_ref[...],
                            preferred_element_type=jnp.float32) + fcb_ref[...])


@jax.jit
def gru_forward(token_ids, emb_table, w_ih, w_hh, b_ih, b_hh, fc_w, fc_b):
    """Full forward pass of the PyTorch GRU module.

    token_ids : (batch, seq) int32
    emb_table : (vocab, emb)
    w_ih      : (3H, E)   (PyTorch layout, gate order r, z, n)
    w_hh      : (3H, H)
    b_ih,b_hh : (3H,)
    fc_w      : (C, H)
    fc_b      : (C,)
    returns   : (batch, C) float32
    """
    batch, seq_len = token_ids.shape
    emb_size = emb_table.shape[1]
    hidden = w_hh.shape[1]
    num_classes = fc_w.shape[0]

    # Embedding gather + transpose(0,1): glue in plain JAX (gather has no cheap
    # in-kernel equivalent at this scale).  Flatten (S, B) so the kernel's input
    # projection is one well-utilized MXU matmul.
    # TODO(synk): when vocab*3H << S*B*E, precompute emb_table @ W_ih^T (vocab, 3H) here
    # and gather gi directly with token_ids, eliminating Phase 1 and the x input entirely.
    x_emb = jnp.take(emb_table, token_ids, axis=0)                 # (B, S, E)
    x_emb = jnp.transpose(x_emb, (1, 0, 2)).astype(jnp.float32)    # (S, B, E)
    x_flat = x_emb.reshape(seq_len * batch, emb_size)              # (S*B, E)

    # Gate-concatenated, pre-transposed weights: columns ordered (r | z | n).
    w_ih_t = jnp.asarray(w_ih, jnp.float32).T                      # (E, 3H)
    w_hh_t = jnp.asarray(w_hh, jnp.float32).T                      # (H, 3H)

    b_ih_f = jnp.asarray(b_ih, jnp.float32)
    b_hh_f = jnp.asarray(b_hh, jnp.float32)
    # [b_ir+b_hr | b_iz+b_hz | b_in] folds into the precomputed input projections;
    # b_hn stays separate (it sits inside r * (h W_hn^T + b_hn)).
    bi = jnp.concatenate([b_ih_f[:2 * hidden] + b_hh_f[:2 * hidden],
                          b_ih_f[2 * hidden:]]).reshape(1, 3 * hidden)
    b_hn = b_hh_f[2 * hidden:].reshape(1, hidden)

    fc_w_t = jnp.asarray(fc_w, jnp.float32).T                      # (H, C)
    fc_b_r = jnp.asarray(fc_b, jnp.float32).reshape(1, -1)

    # VMEM budget derived from the actual f32 buffer footprint (x input, gi scratch,
    # weights) with 2x headroom, capped below v7x's 64 MiB physical VMEM.
    # TODO(synk): at production sizes, cast MXU operands to bf16 (f32 accumulation,
    # f32 elementwise on v5e), pad H/3H toward 128-lane tiles, time-chunk the gi scratch
    # for long sequences, and add a batch-parallel grid axis for v7x's 2 TensorCores.
    gi_bytes = seq_len * batch * 3 * hidden * 4
    x_bytes = seq_len * batch * emb_size * 4
    w_bytes = 4 * (emb_size * 3 * hidden + hidden * 3 * hidden
                   + hidden * num_classes + 4 * hidden + num_classes)
    vmem_bytes = int(min(max(2 * (gi_bytes + x_bytes + w_bytes) + (4 << 20), 16 << 20),
                         56 << 20))

    pred = pl.pallas_call(
        gru_kernel,
        out_shape=jax.ShapeDtypeStruct((batch, num_classes), jnp.float32),
        scratch_shapes=[
            pltpu.VMEM((seq_len * batch, 3 * hidden), jnp.float32),   # gi (r|z|n)
        ],
        compiler_params=pltpu.CompilerParams(vmem_limit_bytes=vmem_bytes),
    )(x_flat, w_ih_t, w_hh_t, bi, b_hn, fc_w_t, fc_b_r)
    return pred


def gru_forward_ref(token_ids, emb_table, w_ih, w_hh, b_ih, b_hh, fc_w, fc_b):
    """Pure-JAX reference (mirrors torch semantics) for validation."""
    x = jnp.take(emb_table, token_ids, axis=0).astype(jnp.float32)  # (B, S, E)
    x = jnp.transpose(x, (1, 0, 2))                                 # (S, B, E)
    batch = x.shape[1]
    hidden = w_hh.shape[1]
    h0 = jnp.zeros((batch, hidden), jnp.float32)

    def step(h, x_t):
        gi = x_t @ w_ih.T + b_ih
        gh = h @ w_hh.T + b_hh
        i_r, i_z, i_n = jnp.split(gi, 3, axis=-1)
        h_r, h_z, h_n = jnp.split(gh, 3, axis=-1)
        r = jax.nn.sigmoid(i_r + h_r)
        z = jax.nn.sigmoid(i_z + h_z)
        n = jnp.tanh(i_n + r * h_n)
        h_new = (1.0 - z) * n + z * h
        return h_new, None

    h_last, _ = jax.lax.scan(step, h0, x)
    return h_last @ fc_w.T + fc_b


if __name__ == "__main__":
    # Small, deterministic configuration.
    vocab_size, emb_size, hidden_size, num_classes = 64, 32, 32, 8
    batch_size, seq_len = 8, 8

    key = jax.random.PRNGKey(0)
    keys = jax.random.split(key, 8)
    bound = 1.0 / jnp.sqrt(hidden_size)

    token_ids = jax.random.randint(keys[0], (batch_size, seq_len), 0, vocab_size,
                                   dtype=jnp.int32)
    emb_table = jax.random.normal(keys[1], (vocab_size, emb_size), jnp.float32)
    w_ih = jax.random.uniform(keys[2], (3 * hidden_size, emb_size), jnp.float32,
                              -bound, bound)
    w_hh = jax.random.uniform(keys[3], (3 * hidden_size, hidden_size), jnp.float32,
                              -bound, bound)
    b_ih = jax.random.uniform(keys[4], (3 * hidden_size,), jnp.float32, -bound, bound)
    b_hh = jax.random.uniform(keys[5], (3 * hidden_size,), jnp.float32, -bound, bound)
    fc_w = jax.random.uniform(keys[6], (num_classes, hidden_size), jnp.float32,
                              -bound, bound)
    fc_b = jax.random.uniform(keys[7], (num_classes,), jnp.float32, -bound, bound)

    pred = gru_forward(token_ids, emb_table, w_ih, w_hh, b_ih, b_hh, fc_w, fc_b)
    pred = jax.block_until_ready(pred)

    ref = gru_forward_ref(token_ids, emb_table, w_ih, w_hh, b_ih, b_hh, fc_w, fc_b)
    assert pred.shape == (batch_size, num_classes)
    assert jnp.allclose(pred, ref, atol=1e-5, rtol=1e-5), "mismatch vs reference"

    print("KERNEL_OK")
</pallas_src>

<mosaic_0001>
module attributes {stable_mosaic.version = 11 : i64} {
  func.func @gru_kernel(%arg0: memref<64x32xf32, #tpu.memory_space<vmem>>, %arg1: memref<32x96xf32, #tpu.memory_space<vmem>>, %arg2: memref<32x96xf32, #tpu.memory_space<vmem>>, %arg3: memref<1x96xf32, #tpu.memory_space<vmem>>, %arg4: memref<1x32xf32, #tpu.memory_space<vmem>>, %arg5: memref<32x8xf32, #tpu.memory_space<vmem>>, %arg6: memref<1x8xf32, #tpu.memory_space<vmem>>, %arg7: memref<8x8xf32, #tpu.memory_space<vmem>>, %arg8: memref<64x96xf32, #tpu.memory_space<vmem>>) attributes {dimension_semantics = [], scalar_prefetch = 0 : i64, scratch_operands = 1 : i64, tpu.core_type = #tpu.core_type<tc>} {
    %c0 = arith.constant 0 : index
    %c0_0 = arith.constant 0 : index
    %0 = vector.load %arg0[%c0, %c0_0] : memref<64x32xf32, #tpu.memory_space<vmem>>, vector<64x32xf32>
    %c0_1 = arith.constant 0 : index
    %c0_2 = arith.constant 0 : index
    %1 = vector.load %arg1[%c0_1, %c0_2] : memref<32x96xf32, #tpu.memory_space<vmem>>, vector<32x96xf32>
    %cst = arith.constant dense<0.000000e+00> : vector<64x96xf32>
    %2 = tpu.matmul %0, %1, %cst {dimension_numbers = #tpu.dot_dimension_numbers<[1], [0], [0], [1], [0, 0, 1, 1], [], []>} : vector<64x32xf32>, vector<32x96xf32>, vector<64x96xf32> -> vector<64x96xf32>
    %c0_3 = arith.constant 0 : index
    %c0_4 = arith.constant 0 : index
    %3 = vector.load %arg3[%c0_3, %c0_4] : memref<1x96xf32, #tpu.memory_space<vmem>>, vector<1x96xf32>
    %4 = vector.broadcast %3 : vector<1x96xf32> to vector<64x96xf32>
    %5 = arith.addf %2, %4 : vector<64x96xf32>
    %c0_5 = arith.constant 0 : index
    %c0_6 = arith.constant 0 : index
    %6 = vector.load %arg8[%c0_5, %c0_6] : memref<64x96xf32, #tpu.memory_space<vmem>>, vector<64x96xf32>
    tpu.vector_store %arg8[%c0_5, %c0_6], %5 {strides = array<i32>} : memref<64x96xf32, #tpu.memory_space<vmem>>, vector<64x96xf32>,
    %c0_7 = arith.constant 0 : index
    %c0_8 = arith.constant 0 : index
    %7 = vector.load %arg2[%c0_7, %c0_8] : memref<32x96xf32, #tpu.memory_space<vmem>>, vector<32x96xf32>
    %c0_9 = arith.constant 0 : index
    %c0_10 = arith.constant 0 : index
    %8 = vector.load %arg4[%c0_9, %c0_10] : memref<1x32xf32, #tpu.memory_space<vmem>>, vector<1x32xf32>
    %9 = vector.shape_cast %8 : vector<1x32xf32> to vector<1x32xf32>
    %10 = vector.broadcast %9 : vector<1x32xf32> to vector<8x32xf32>
    %cst_11 = arith.constant 0.000000e+00 : f32
    %11 = vector.broadcast %cst_11 : f32 to vector<8x32xf32>
    %c0_i32 = arith.constant 0 : i32
    %c8_i32 = arith.constant 8 : i32
    %12 = arith.muli %c0_i32, %c8_i32 : i32
    %13 = tpu.assume_multiple %12, 8 : i32
    %14 = arith.index_cast %13 : i32 to index
    %c0_12 = arith.constant 0 : index
    %15 = vector.load %arg8[%14, %c0_12] : memref<64x96xf32, #tpu.memory_space<vmem>>, vector<8x96xf32>
    %cst_13 = arith.constant dense<0.000000e+00> : vector<8x96xf32>
    %16 = tpu.matmul %11, %7, %cst_13 {dimension_numbers = #tpu.dot_dimension_numbers<[1], [0], [0], [1], [0, 0, 1, 1], [], []>} : vector<8x32xf32>, vector<32x96xf32>, vector<8x96xf32> -> vector<8x96xf32>
    %17 = vector.extract_strided_slice %15 {offsets = [0, 0], sizes = [8, 32], strides = [1, 1]} : vector<8x96xf32> to vector<8x32xf32>
    %18 = vector.extract_strided_slice %16 {offsets = [0, 0], sizes = [8, 32], strides = [1, 1]} : vector<8x96xf32> to vector<8x32xf32>
    %19 = arith.addf %17, %18 : vector<8x32xf32>
    %20 = arith.negf %19 : vector<8x32xf32>
    %21 = math.exp %20 : vector<8x32xf32>
    %cst_14 = arith.constant 1.000000e+00 : f32
    %22 = vector.broadcast %cst_14 : f32 to vector<8x32xf32>
    %23 = arith.addf %22, %21 : vector<8x32xf32>
    %24 = arith.divf %22, %23 : vector<8x32xf32>
    %25 = vector.extract_strided_slice %15 {offsets = [0, 32], sizes = [8, 32], strides = [1, 1]} : vector<8x96xf32> to vector<8x32xf32>
    %26 = vector.extract_strided_slice %16 {offsets = [0, 32], sizes = [8, 32], strides = [1, 1]} : vector<8x96xf32> to vector<8x32xf32>
    %27 = arith.addf %25, %26 : vector<8x32xf32>
    %28 = arith.negf %27 : vector<8x32xf32>
    %29 = math.exp %28 : vector<8x32xf32>
    %cst_15 = arith.constant 1.000000e+00 : f32
    %30 = vector.broadcast %cst_15 : f32 to vector<8x32xf32>
    %31 = arith.addf %30, %29 : vector<8x32xf32>
    %32 = arith.divf %30, %31 : vector<8x32xf32>
    %33 = vector.extract_strided_slice %15 {offsets = [0, 64], sizes = [8, 32], strides = [1, 1]} : vector<8x96xf32> to vector<8x32xf32>
    %34 = vector.extract_strided_slice %16 {offsets = [0, 64], sizes = [8, 32], strides = [1, 1]} : vector<8x96xf32> to vector<8x32xf32>
    %35 = arith.addf %34, %10 : vector<8x32xf32>
    %36 = arith.mulf %24, %35 : vector<8x32xf32>
    %37 = arith.addf %33, %36 : vector<8x32xf32>
    %38 = math.tanh %37 : vector<8x32xf32>
    %cst_16 = arith.constant 1.000000e+00 : f32
    %39 = vector.broadcast %cst_16 : f32 to vector<8x32xf32>
    %40 = arith.subf %39, %32 : vector<8x32xf32>
    %41 = arith.mulf %40, %38 : vector<8x32xf32>
    %42 = arith.mulf %32, %11 : vector<8x32xf32>
    %43 = arith.addf %41, %42 : vector<8x32xf32>
    %c1_i32 = arith.constant 1 : i32
    %c8_i32_17 = arith.constant 8 : i32
    %44 = arith.muli %c1_i32, %c8_i32_17 : i32
    %45 = tpu.assume_multiple %44, 8 : i32
    %46 = arith.index_cast %45 : i32 to index
    %c0_18 = arith.constant 0 : index
    %47 = vector.load %arg8[%46, %c0_18] : memref<64x96xf32, #tpu.memory_space<vmem>>, vector<8x96xf32>
    %cst_19 = arith.constant dense<0.000000e+00> : vector<8x96xf32>
    %48 = tpu.matmul %43, %7, %cst_19 {dimension_numbers = #tpu.dot_dimension_numbers<[1], [0], [0], [1], [0, 0, 1, 1], [], []>} : vector<8x32xf32>, vector<32x96xf32>, vector<8x96xf32> -> vector<8x96xf32>
    %49 = vector.extract_strided_slice %47 {offsets = [0, 0], sizes = [8, 32], strides = [1, 1]} : vector<8x96xf32> to vector<8x32xf32>
    %50 = vector.extract_strided_slice %48 {offsets = [0, 0], sizes = [8, 32], strides = [1, 1]} : vector<8x96xf32> to vector<8x32xf32>
    %51 = arith.addf %49, %50 : vector<8x32xf32>
    %52 = arith.negf %51 : vector<8x32xf32>
    %53 = math.exp %52 : vector<8x32xf32>
    %cst_20 = arith.constant 1.000000e+00 : f32
    %54 = vector.broadcast %cst_20 : f32 to vector<8x32xf32>
    %55 = arith.addf %54, %53 : vector<8x32xf32>
    %56 = arith.divf %54, %55 : vector<8x32xf32>
    %57 = vector.extract_strided_slice %47 {offsets = [0, 32], sizes = [8, 32], strides = [1, 1]} : vector<8x96xf32> to vector<8x32xf32>
    %58 = vector.extract_strided_slice %48 {offsets = [0, 32], sizes = [8, 32], strides = [1, 1]} : vector<8x96xf32> to vector<8x32xf32>
    %59 = arith.addf %57, %58 : vector<8x32xf32>
    %60 = arith.negf %59 : vector<8x32xf32>
    %61 = math.exp %60 : vector<8x32xf32>
    %cst_21 = arith.constant 1.000000e+00 : f32
    %62 = vector.broadcast %cst_21 : f32 to vector<8x32xf32>
    %63 = arith.addf %62, %61 : vector<8x32xf32>
    %64 = arith.divf %62, %63 : vector<8x32xf32>
    %65 = vector.extract_strided_slice %47 {offsets = [0, 64], sizes = [8, 32], strides = [1, 1]} : vector<8x96xf32> to vector<8x32xf32>
    %66 = vector.extract_strided_slice %48 {offsets = [0, 64], sizes = [8, 32], strides = [1, 1]} : vector<8x96xf32> to vector<8x32xf32>
    %67 = arith.addf %66, %10 : vector<8x32xf32>
    %68 = arith.mulf %56, %67 : vector<8x32xf32>
    %69 = arith.addf %65, %68 : vector<8x32xf32>
    %70 = math.tanh %69 : vector<8x32xf32>
    %cst_22 = arith.constant 1.000000e+00 : f32
    %71 = vector.broadcast %cst_22 : f32 to vector<8x32xf32>
    %72 = arith.subf %71, %64 : vector<8x32xf32>
    %73 = arith.mulf %72, %70 : vector<8x32xf32>
    %74 = arith.mulf %64, %43 : vector<8x32xf32>
    %75 = arith.addf %73, %74 : vector<8x32xf32>
    %c2_i32 = arith.constant 2 : i32
    %c8_i32_23 = arith.constant 8 : i32
    %76 = arith.muli %c2_i32, %c8_i32_23 : i32
    %77 = tpu.assume_multiple %76, 8 : i32
    %78 = arith.index_cast %77 : i32 to index
    %c0_24 = arith.constant 0 : index
    %79 = vector.load %arg8[%78, %c0_24] : memref<64x96xf32, #tpu.memory_space<vmem>>, vector<8x96xf32>
    %cst_25 = arith.constant dense<0.000000e+00> : vector<8x96xf32>
    %80 = tpu.matmul %75, %7, %cst_25 {dimension_numbers = #tpu.dot_dimension_numbers<[1], [0], [0], [1], [0, 0, 1, 1], [], []>} : vector<8x32xf32>, vector<32x96xf32>, vector<8x96xf32> -> vector<8x96xf32>
    %81 = vector.extract_strided_slice %79 {offsets = [0, 0], sizes = [8, 32], strides = [1, 1]} : vector<8x96xf32> to vector<8x32xf32>
    %82 = vector.extract_strided_slice %80 {offsets = [0, 0], sizes = [8, 32], strides = [1, 1]} : vector<8x96xf32> to vector<8x32xf32>
    %83 = arith.addf %81, %82 : vector<8x32xf32>
    %84 = arith.negf %83 : vector<8x32xf32>
    %85 = math.exp %84 : vector<8x32xf32>
    %cst_26 = arith.constant 1.000000e+00 : f32
    %86 = vector.broadcast %cst_26 : f32 to vector<8x32xf32>
    %87 = arith.addf %86, %85 : vector<8x32xf32>
    %88 = arith.divf %86, %87 : vector<8x32xf32>
    %89 = vector.extract_strided_slice %79 {offsets = [0, 32], sizes = [8, 32], strides = [1, 1]} : vector<8x96xf32> to vector<8x32xf32>
    %90 = vector.extract_strided_slice %80 {offsets = [0, 32], sizes = [8, 32], strides = [1, 1]} : vector<8x96xf32> to vector<8x32xf32>
    %91 = arith.addf %89, %90 : vector<8x32xf32>
    %92 = arith.negf %91 : vector<8x32xf32>
    %93 = math.exp %92 : vector<8x32xf32>
    %cst_27 = arith.constant 1.000000e+00 : f32
    %94 = vector.broadcast %cst_27 : f32 to vector<8x32xf32>
    %95 = arith.addf %94, %93 : vector<8x32xf32>
    %96 = arith.divf %94, %95 : vector<8x32xf32>
    %97 = vector.extract_strided_slice %79 {offsets = [0, 64], sizes = [8, 32], strides = [1, 1]} : vector<8x96xf32> to vector<8x32xf32>
    %98 = vector.extract_strided_slice %80 {offsets = [0, 64], sizes = [8, 32], strides = [1, 1]} : vector<8x96xf32> to vector<8x32xf32>
    %99 = arith.addf %98, %10 : vector<8x32xf32>
    %100 = arith.mulf %88, %99 : vector<8x32xf32>
    %101 = arith.addf %97, %100 : vector<8x32xf32>
    %102 = math.tanh %101 : vector<8x32xf32>
    %cst_28 = arith.constant 1.000000e+00 : f32
    %103 = vector.broadcast %cst_28 : f32 to vector<8x32xf32>
    %104 = arith.subf %103, %96 : vector<8x32xf32>
    %105 = arith.mulf %104, %102 : vector<8x32xf32>
    %106 = arith.mulf %96, %75 : vector<8x32xf32>
    %107 = arith.addf %105, %106 : vector<8x32xf32>
    %c3_i32 = arith.constant 3 : i32
    %c8_i32_29 = arith.constant 8 : i32
    %108 = arith.muli %c3_i32, %c8_i32_29 : i32
    %109 = tpu.assume_multiple %108, 8 : i32
    %110 = arith.index_cast %109 : i32 to index
    %c0_30 = arith.constant 0 : index
    %111 = vector.load %arg8[%110, %c0_30] : memref<64x96xf32, #tpu.memory_space<vmem>>, vector<8x96xf32>
    %cst_31 = arith.constant dense<0.000000e+00> : vector<8x96xf32>
    %112 = tpu.matmul %107, %7, %cst_31 {dimension_numbers = #tpu.dot_dimension_numbers<[1], [0], [0], [1], [0, 0, 1, 1], [], []>} : vector<8x32xf32>, vector<32x96xf32>, vector<8x96xf32> -> vector<8x96xf32>
    %113 = vector.extract_strided_slice %111 {offsets = [0, 0], sizes = [8, 32], strides = [1, 1]} : vector<8x96xf32> to vector<8x32xf32>
    %114 = vector.extract_strided_slice %112 {offsets = [0, 0], sizes = [8, 32], strides = [1, 1]} : vector<8x96xf32> to vector<8x32xf32>
    %115 = arith.addf %113, %114 : vector<8x32xf32>
    %116 = arith.negf %115 : vector<8x32xf32>
    %117 = math.exp %116 : vector<8x32xf32>
    %cst_32 = arith.constant 1.000000e+00 : f32
    %118 = vector.broadcast %cst_32 : f32 to vector<8x32xf32>
    %119 = arith.addf %118, %117 : vector<8x32xf32>
    %120 = arith.divf %118, %119 : vector<8x32xf32>
    %121 = vector.extract_strided_slice %111 {offsets = [0, 32], sizes = [8, 32], strides = [1, 1]} : vector<8x96xf32> to vector<8x32xf32>
    %122 = vector.extract_strided_slice %112 {offsets = [0, 32], sizes = [8, 32], strides = [1, 1]} : vector<8x96xf32> to vector<8x32xf32>
    %123 = arith.addf %121, %122 : vector<8x32xf32>
    %124 = arith.negf %123 : vector<8x32xf32>
    %125 = math.exp %124 : vector<8x32xf32>
    %cst_33 = arith.constant 1.000000e+00 : f32
    %126 = vector.broadcast %cst_33 : f32 to vector<8x32xf32>
    %127 = arith.addf %126, %125 : vector<8x32xf32>
    %128 = arith.divf %126, %127 : vector<8x32xf32>
    %129 = vector.extract_strided_slice %111 {offsets = [0, 64], sizes = [8, 32], strides = [1, 1]} : vector<8x96xf32> to vector<8x32xf32>
    %130 = vector.extract_strided_slice %112 {offsets = [0, 64], sizes = [8, 32], strides = [1, 1]} : vector<8x96xf32> to vector<8x32xf32>
    %131 = arith.addf %130, %10 : vector<8x32xf32>
    %132 = arith.mulf %120, %131 : vector<8x32xf32>
    %133 = arith.addf %129, %132 : vector<8x32xf32>
    %134 = math.tanh %133 : vector<8x32xf32>
    %cst_34 = arith.constant 1.000000e+00 : f32
    %135 = vector.broadcast %cst_34 : f32 to vector<8x32xf32>
    %136 = arith.subf %135, %128 : vector<8x32xf32>
    %137 = arith.mulf %136, %134 : vector<8x32xf32>
    %138 = arith.mulf %128, %107 : vector<8x32xf32>
    %139 = arith.addf %137, %138 : vector<8x32xf32>
    %c4_i32 = arith.constant 4 : i32
    %c8_i32_35 = arith.constant 8 : i32
    %140 = arith.muli %c4_i32, %c8_i32_35 : i32
    %141 = tpu.assume_multiple %140, 8 : i32
    %142 = arith.index_cast %141 : i32 to index
    %c0_36 = arith.constant 0 : index
    %143 = vector.load %arg8[%142, %c0_36] : memref<64x96xf32, #tpu.memory_space<vmem>>, vector<8x96xf32>
    %cst_37 = arith.constant dense<0.000000e+00> : vector<8x96xf32>
    %144 = tpu.matmul %139, %7, %cst_37 {dimension_numbers = #tpu.dot_dimension_numbers<[1], [0], [0], [1], [0, 0, 1, 1], [], []>} : vector<8x32xf32>, vector<32x96xf32>, vector<8x96xf32> -> vector<8x96xf32>
    %145 = vector.extract_strided_slice %143 {offsets = [0, 0], sizes = [8, 32], strides = [1, 1]} : vector<8x96xf32> to vector<8x32xf32>
    %146 = vector.extract_strided_slice %144 {offsets = [0, 0], sizes = [8, 32], strides = [1, 1]} : vector<8x96xf32> to vector<8x32xf32>
    %147 = arith.addf %145, %146 : vector<8x32xf32>
    %148 = arith.negf %147 : vector<8x32xf32>
    %149 = math.exp %148 : vector<8x32xf32>
    %cst_38 = arith.constant 1.000000e+00 : f32
    %150 = vector.broadcast %cst_38 : f32 to vector<8x32xf32>
    %151 = arith.addf %150, %149 : vector<8x32xf32>
    %152 = arith.divf %150, %151 : vector<8x32xf32>
    %153 = vector.extract_strided_slice %143 {offsets = [0, 32], sizes = [8, 32], strides = [1, 1]} : vector<8x96xf32> to vector<8x32xf32>
    %154 = vector.extract_strided_slice %144 {offsets = [0, 32], sizes = [8, 32], strides = [1, 1]} : vector<8x96xf32> to vector<8x32xf32>
    %155 = arith.addf %153, %154 : vector<8x32xf32>
    %156 = arith.negf %155 : vector<8x32xf32>
    %157 = math.exp %156 : vector<8x32xf32>
    %cst_39 = arith.constant 1.000000e+00 : f32
    %158 = vector.broadcast %cst_39 : f32 to vector<8x32xf32>
    %159 = arith.addf %158, %157 : vector<8x32xf32>
    %160 = arith.divf %158, %159 : vector<8x32xf32>
    %161 = vector.extract_strided_slice %143 {offsets = [0, 64], sizes = [8, 32], strides = [1, 1]} : vector<8x96xf32> to vector<8x32xf32>
    %162 = vector.extract_strided_slice %144 {offsets = [0, 64], sizes = [8, 32], strides = [1, 1]} : vector<8x96xf32> to vector<8x32xf32>
    %163 = arith.addf %162, %10 : vector<8x32xf32>
    %164 = arith.mulf %152, %163 : vector<8x32xf32>
    %165 = arith.addf %161, %164 : vector<8x32xf32>
    %166 = math.tanh %165 : vector<8x32xf32>
    %cst_40 = arith.constant 1.000000e+00 : f32
    %167 = vector.broadcast %cst_40 : f32 to vector<8x32xf32>
    %168 = arith.subf %167, %160 : vector<8x32xf32>
    %169 = arith.mulf %168, %166 : vector<8x32xf32>
    %170 = arith.mulf %160, %139 : vector<8x32xf32>
    %171 = arith.addf %169, %170 : vector<8x32xf32>
    %c5_i32 = arith.constant 5 : i32
    %c8_i32_41 = arith.constant 8 : i32
    %172 = arith.muli %c5_i32, %c8_i32_41 : i32
    %173 = tpu.assume_multiple %172, 8 : i32
    %174 = arith.index_cast %173 : i32 to index
    %c0_42 = arith.constant 0 : index
    %175 = vector.load %arg8[%174, %c0_42] : memref<64x96xf32, #tpu.memory_space<vmem>>, vector<8x96xf32>
    %cst_43 = arith.constant dense<0.000000e+00> : vector<8x96xf32>
    %176 = tpu.matmul %171, %7, %cst_43 {dimension_numbers = #tpu.dot_dimension_numbers<[1], [0], [0], [1], [0, 0, 1, 1], [], []>} : vector<8x32xf32>, vector<32x96xf32>, vector<8x96xf32> -> vector<8x96xf32>
    %177 = vector.extract_strided_slice %175 {offsets = [0, 0], sizes = [8, 32], strides = [1, 1]} : vector<8x96xf32> to vector<8x32xf32>
    %178 = vector.extract_strided_slice %176 {offsets = [0, 0], sizes = [8, 32], strides = [1, 1]} : vector<8x96xf32> to vector<8x32xf32>
    %179 = arith.addf %177, %178 : vector<8x32xf32>
    %180 = arith.negf %179 : vector<8x32xf32>
    %181 = math.exp %180 : vector<8x32xf32>
    %cst_44 = arith.constant 1.000000e+00 : f32
    %182 = vector.broadcast %cst_44 : f32 to vector<8x32xf32>
    %183 = arith.addf %182, %181 : vector<8x32xf32>
    %184 = arith.divf %182, %183 : vector<8x32xf32>
    %185 = vector.extract_strided_slice %175 {offsets = [0, 32], sizes = [8, 32], strides = [1, 1]} : vector<8x96xf32> to vector<8x32xf32>
    %186 = vector.extract_strided_slice %176 {offsets = [0, 32], sizes = [8, 32], strides = [1, 1]} : vector<8x96xf32> to vector<8x32xf32>
    %187 = arith.addf %185, %186 : vector<8x32xf32>
    %188 = arith.negf %187 : vector<8x32xf32>
    %189 = math.exp %188 : vector<8x32xf32>
    %cst_45 = arith.constant 1.000000e+00 : f32
    %190 = vector.broadcast %cst_45 : f32 to vector<8x32xf32>
    %191 = arith.addf %190, %189 : vector<8x32xf32>
    %192 = arith.divf %190, %191 : vector<8x32xf32>
    %193 = vector.extract_strided_slice %175 {offsets = [0, 64], sizes = [8, 32], strides = [1, 1]} : vector<8x96xf32> to vector<8x32xf32>
    %194 = vector.extract_strided_slice %176 {offsets = [0, 64], sizes = [8, 32], strides = [1, 1]} : vector<8x96xf32> to vector<8x32xf32>
    %195 = arith.addf %194, %10 : vector<8x32xf32>
    %196 = arith.mulf %184, %195 : vector<8x32xf32>
    %197 = arith.addf %193, %196 : vector<8x32xf32>
    %198 = math.tanh %197 : vector<8x32xf32>
    %cst_46 = arith.constant 1.000000e+00 : f32
    %199 = vector.broadcast %cst_46 : f32 to vector<8x32xf32>
    %200 = arith.subf %199, %192 : vector<8x32xf32>
    %201 = arith.mulf %200, %198 : vector<8x32xf32>
    %202 = arith.mulf %192, %171 : vector<8x32xf32>
    %203 = arith.addf %201, %202 : vector<8x32xf32>
    %c6_i32 = arith.constant 6 : i32
    %c8_i32_47 = arith.constant 8 : i32
    %204 = arith.muli %c6_i32, %c8_i32_47 : i32
    %205 = tpu.assume_multiple %204, 8 : i32
    %206 = arith.index_cast %205 : i32 to index
    %c0_48 = arith.constant 0 : index
    %207 = vector.load %arg8[%206, %c0_48] : memref<64x96xf32, #tpu.memory_space<vmem>>, vector<8x96xf32>
    %cst_49 = arith.constant dense<0.000000e+00> : vector<8x96xf32>
    %208 = tpu.matmul %203, %7, %cst_49 {dimension_numbers = #tpu.dot_dimension_numbers<[1], [0], [0], [1], [0, 0, 1, 1], [], []>} : vector<8x32xf32>, vector<32x96xf32>, vector<8x96xf32> -> vector<8x96xf32>
    %209 = vector.extract_strided_slice %207 {offsets = [0, 0], sizes = [8, 32], strides = [1, 1]} : vector<8x96xf32> to vector<8x32xf32>
    %210 = vector.extract_strided_slice %208 {offsets = [0, 0], sizes = [8, 32], strides = [1, 1]} : vector<8x96xf32> to vector<8x32xf32>
    %211 = arith.addf %209, %210 : vector<8x32xf32>
    %212 = arith.negf %211 : vector<8x32xf32>
    %213 = math.exp %212 : vector<8x32xf32>
    %cst_50 = arith.constant 1.000000e+00 : f32
    %214 = vector.broadcast %cst_50 : f32 to vector<8x32xf32>
    %215 = arith.addf %214, %213 : vector<8x32xf32>
    %216 = arith.divf %214, %215 : vector<8x32xf32>
    %217 = vector.extract_strided_slice %207 {offsets = [0, 32], sizes = [8, 32], strides = [1, 1]} : vector<8x96xf32> to vector<8x32xf32>
    %218 = vector.extract_strided_slice %208 {offsets = [0, 32], sizes = [8, 32], strides = [1, 1]} : vector<8x96xf32> to vector<8x32xf32>
    %219 = arith.addf %217, %218 : vector<8x32xf32>
    %220 = arith.negf %219 : vector<8x32xf32>
    %221 = math.exp %220 : vector<8x32xf32>
    %cst_51 = arith.constant 1.000000e+00 : f32
    %222 = vector.broadcast %cst_51 : f32 to vector<8x32xf32>
    %223 = arith.addf %222, %221 : vector<8x32xf32>
    %224 = arith.divf %222, %223 : vector<8x32xf32>
    %225 = vector.extract_strided_slice %207 {offsets = [0, 64], sizes = [8, 32], strides = [1, 1]} : vector<8x96xf32> to vector<8x32xf32>
    %226 = vector.extract_strided_slice %208 {offsets = [0, 64], sizes = [8, 32], strides = [1, 1]} : vector<8x96xf32> to vector<8x32xf32>
    %227 = arith.addf %226, %10 : vector<8x32xf32>
    %228 = arith.mulf %216, %227 : vector<8x32xf32>
    %229 = arith.addf %225, %228 : vector<8x32xf32>
    %230 = math.tanh %229 : vector<8x32xf32>
    %cst_52 = arith.constant 1.000000e+00 : f32
    %231 = vector.broadcast %cst_52 : f32 to vector<8x32xf32>
    %232 = arith.subf %231, %224 : vector<8x32xf32>
    %233 = arith.mulf %232, %230 : vector<8x32xf32>
    %234 = arith.mulf %224, %203 : vector<8x32xf32>
    %235 = arith.addf %233, %234 : vector<8x32xf32>
    %c7_i32 = arith.constant 7 : i32
    %c8_i32_53 = arith.constant 8 : i32
    %236 = arith.muli %c7_i32, %c8_i32_53 : i32
    %237 = tpu.assume_multiple %236, 8 : i32
    %238 = arith.index_cast %237 : i32 to index
    %c0_54 = arith.constant 0 : index
    %239 = vector.load %arg8[%238, %c0_54] : memref<64x96xf32, #tpu.memory_space<vmem>>, vector<8x96xf32>
    %cst_55 = arith.constant dense<0.000000e+00> : vector<8x96xf32>
    %240 = tpu.matmul %235, %7, %cst_55 {dimension_numbers = #tpu.dot_dimension_numbers<[1], [0], [0], [1], [0, 0, 1, 1], [], []>} : vector<8x32xf32>, vector<32x96xf32>, vector<8x96xf32> -> vector<8x96xf32>
    %241 = vector.extract_strided_slice %239 {offsets = [0, 0], sizes = [8, 32], strides = [1, 1]} : vector<8x96xf32> to vector<8x32xf32>
    %242 = vector.extract_strided_slice %240 {offsets = [0, 0], sizes = [8, 32], strides = [1, 1]} : vector<8x96xf32> to vector<8x32xf32>
    %243 = arith.addf %241, %242 : vector<8x32xf32>
    %244 = arith.negf %243 : vector<8x32xf32>
    %245 = math.exp %244 : vector<8x32xf32>
    %cst_56 = arith.constant 1.000000e+00 : f32
    %246 = vector.broadcast %cst_56 : f32 to vector<8x32xf32>
    %247 = arith.addf %246, %245 : vector<8x32xf32>
    %248 = arith.divf %246, %247 : vector<8x32xf32>
    %249 = vector.extract_strided_slice %239 {offsets = [0, 32], sizes = [8, 32], strides = [1, 1]} : vector<8x96xf32> to vector<8x32xf32>
    %250 = vector.extract_strided_slice %240 {offsets = [0, 32], sizes = [8, 32], strides = [1, 1]} : vector<8x96xf32> to vector<8x32xf32>
    %251 = arith.addf %249, %250 : vector<8x32xf32>
    %252 = arith.negf %251 : vector<8x32xf32>
    %253 = math.exp %252 : vector<8x32xf32>
    %cst_57 = arith.constant 1.000000e+00 : f32
    %254 = vector.broadcast %cst_57 : f32 to vector<8x32xf32>
    %255 = arith.addf %254, %253 : vector<8x32xf32>
    %256 = arith.divf %254, %255 : vector<8x32xf32>
    %257 = vector.extract_strided_slice %239 {offsets = [0, 64], sizes = [8, 32], strides = [1, 1]} : vector<8x96xf32> to vector<8x32xf32>
    %258 = vector.extract_strided_slice %240 {offsets = [0, 64], sizes = [8, 32], strides = [1, 1]} : vector<8x96xf32> to vector<8x32xf32>
    %259 = arith.addf %258, %10 : vector<8x32xf32>
    %260 = arith.mulf %248, %259 : vector<8x32xf32>
    %261 = arith.addf %257, %260 : vector<8x32xf32>
    %262 = math.tanh %261 : vector<8x32xf32>
    %cst_58 = arith.constant 1.000000e+00 : f32
    %263 = vector.broadcast %cst_58 : f32 to vector<8x32xf32>
    %264 = arith.subf %263, %256 : vector<8x32xf32>
    %265 = arith.mulf %264, %262 : vector<8x32xf32>
    %266 = arith.mulf %256, %235 : vector<8x32xf32>
    %267 = arith.addf %265, %266 : vector<8x32xf32>
    %c8_i32_59 = arith.constant 8 : i32
    %c0_60 = arith.constant 0 : index
    %c0_61 = arith.constant 0 : index
    %268 = vector.load %arg5[%c0_60, %c0_61] : memref<32x8xf32, #tpu.memory_space<vmem>>, vector<32x8xf32>
    %cst_62 = arith.constant dense<0.000000e+00> : vector<8x8xf32>
    %269 = tpu.matmul %267, %268, %cst_62 {dimension_numbers = #tpu.dot_dimension_numbers<[1], [0], [0], [1], [0, 0, 1, 1], [], []>} : vector<8x32xf32>, vector<32x8xf32>, vector<8x8xf32> -> vector<8x8xf32>
    %c0_63 = arith.constant 0 : index
    %c0_64 = arith.constant 0 : index
    %270 = vector.load %arg6[%c0_63, %c0_64] : memref<1x8xf32, #tpu.memory_space<vmem>>, vector<1x8xf32>
    %271 = vector.broadcast %270 : vector<1x8xf32> to vector<8x8xf32>
    %272 = arith.addf %269, %271 : vector<8x8xf32>
    %c0_65 = arith.constant 0 : index
    %c0_66 = arith.constant 0 : index
    %273 = vector.load %arg7[%c0_65, %c0_66] : memref<8x8xf32, #tpu.memory_space<vmem>>, vector<8x8xf32>
    tpu.vector_store %arg7[%c0_65, %c0_66], %272 {strides = array<i32>} : memref<8x8xf32, #tpu.memory_space<vmem>>, vector<8x8xf32>,
    return
  }
}

</mosaic_0001>

<llo_original>
// kernel: gru_forward.1
$region0: #{gru_forward.1}
  #allocation0 [shape = 'u32[]', space=smem, size = 0x4, offset = 0x4, fixed_abs, tag = 'smem constant byte address 0x4 - core index']
  #allocation1 [shape = 'u32[72,128]{1,0:T(1,128)}', space=vmem, size = 0x9000, scoped, tag = 'internal scratch']
  #allocation2 [shape = 'f32[64,96]{1,0:T(8,128)}', space=vmem, size = 0x8000, scoped, tag = 'scratch operand']
  %s0 = inlined_call_operand.vmem [shape: f32[64,32], index: 0, kind: input, shape index: {}]
  %s1 = inlined_call_operand.vmem [shape: f32[32,96], index: 1, kind: input, shape index: {}]
  %s2 = inlined_call_operand.vmem [shape: f32[32,96], index: 2, kind: input, shape index: {}]
  %s3 = inlined_call_operand.vmem [shape: f32[1,96], index: 3, kind: input, shape index: {}]
  %s4 = inlined_call_operand.vmem [shape: f32[1,32], index: 4, kind: input, shape index: {}]
  %s5 = inlined_call_operand.vmem [shape: f32[32,8], index: 5, kind: input, shape index: {}]
  %s6 = inlined_call_operand.vmem [shape: f32[1,8], index: 6, kind: input, shape index: {}]
  %s7 = inlined_call_operand.hbm [shape: f32[8,8], index: 7, kind: output, shape index: {}]
  %s8 = sld [smem:[#allocation0]]
  $region38: #{gru_forward.1} parent=0
    _
  %s10 = ssub.s32 1, %s8
  %s11 = scalar_select 0, %s10, %s8
  $region1: #{gru_forward.1} parent=0
    #allocation3 [shape = 'u8[4096]{0}', space=vmem, size = 0x1000, scoped, tag = 'output window, operand 0, single buffered']
    #allocation4 [shape = 's32[1]{0}', space=sflag, size = 0x4, scoped, tag = 'scoped memory for gru_forward.1']
    %12 = vsyncpa [#allocation4], 0
    // Predicated region
    $region2: #{gru_forward.1} parent=1 // pred_check
      _
    $region3: #{gru_forward.1} parent=1 // pred_check_branch
      %14 = sbr.rel (0) target = $region5
    $region4: #{gru_forward.1} parent=1 // pred_region
      _
    $region5: #{gru_forward.1} parent=1 // pred_fallthru
      _
    // Predicated region
    $region6: #{gru_forward.1} parent=1 // pred_check
      _
    $region7: #{gru_forward.1} parent=1 // pred_check_branch
      %16 = sbr.rel (0) target = $region9
    $region8: #{gru_forward.1} parent=1 // pred_region
      _
    $region9: #{gru_forward.1} parent=1 // pred_fallthru
      _
    // Predicated region
    $region10: #{gru_forward.1} parent=1 // pred_check
      _
    $region11: #{gru_forward.1} parent=1 // pred_check_branch
      %18 = sbr.rel (0) target = $region13
    $region12: #{gru_forward.1} parent=1 // pred_region
      _
    $region13: #{gru_forward.1} parent=1 // pred_fallthru
      _
    // Predicated region
    $region14: #{gru_forward.1} parent=1 // pred_check
      _
    $region15: #{gru_forward.1} parent=1 // pred_check_branch
      %20 = sbr.rel (0) target = $region17
    $region16: #{gru_forward.1} parent=1 // pred_region
      _
    $region17: #{gru_forward.1} parent=1 // pred_fallthru
      _
    // Predicated region
    $region18: #{gru_forward.1} parent=1 // pred_check
      _
    $region19: #{gru_forward.1} parent=1 // pred_check_branch
      %22 = sbr.rel (0) target = $region21
    $region20: #{gru_forward.1} parent=1 // pred_region
      _
    $region21: #{gru_forward.1} parent=1 // pred_fallthru
      _
    // Predicated region
    $region22: #{gru_forward.1} parent=1 // pred_check
      _
    $region23: #{gru_forward.1} parent=1 // pred_check_branch
      %24 = sbr.rel (0) target = $region25
    $region24: #{gru_forward.1} parent=1 // pred_region
      _
    $region25: #{gru_forward.1} parent=1 // pred_fallthru
      _
    // Predicated region
    $region26: #{gru_forward.1} parent=1 // pred_check
      _
    $region27: #{gru_forward.1} parent=1 // pred_check_branch
      %26 = sbr.rel (0) target = $region29
    $region28: #{gru_forward.1} parent=1 // pred_region
      _
    $region29: #{gru_forward.1} parent=1 // pred_fallthru
      _
    %v27 = vld [vmem:[%s0] sm:$0xff]
    %v28 = vld [vmem:[%s0 + $0x8] sm:$0xff]
    %v29 = vld [vmem:[%s0 + $0x10] sm:$0xff]
    %v30 = vld [vmem:[%s0 + $0x18] sm:$0xff]
    %v31 = vld [vmem:[%s0 + $0x20] sm:$0xff]
    %v32 = vld [vmem:[%s0 + $0x28] sm:$0xff]
    %v33 = vld [vmem:[%s0 + $0x30] sm:$0xff]
    %v34 = vld [vmem:[%s0 + $0x38] sm:$0xff]
    %v35 = vld [vmem:[%s1] sm:$0xff]
    %v36 = vld [vmem:[%s1 + $0x8] sm:$0xff]
    %v37 = vld [vmem:[%s1 + $0x10] sm:$0xff]
    %v38 = vld [vmem:[%s1 + $0x18] sm:$0xff]
    %v39 = vld [vmem:[%s3] sm:$0x1]
    %v41 = vperm.slane %v39, 0
    %vm43 = vcmask 261120
    %v45 = vsel %vm43, %v27, 0
    %v48 = vsel %vm43, %v28, 0
    %v51 = vsel %vm43, %v29, 0
    %v54 = vsel %vm43, %v30, 0
    %v57 = vsel %vm43, %v31, 0
    %v60 = vsel %vm43, %v32, 0
    %v63 = vsel %vm43, %v33, 0
    %v66 = vsel %vm43, %v34, 0
    %68 = vmatpush.msra.mxu0 0.0
    %69 = vmatpush.msra.mxu0 0.0
    %70 = vmatpush.msra.mxu0 0.0
    %71 = vmatpush.msra.mxu0 0.0
    %72 = vmatpush.msra.mxu0 0.0
    %73 = vmatpush.msra.mxu0 0.0
    %74 = vmatpush.msra.mxu0 0.0
    %75 = vmatpush.msra.mxu0 0.0
    %76 = vmatpush.msra.mxu0 0.0
    %77 = vmatpush.msra.mxu0 0.0
    %78 = vmatpush.msra.mxu0 0.0
    %79 = vmatpush.msra.mxu0 0.0
    %80 = vmatpush.msra.mxu0 %v38
    %81 = vmatpush.msra.mxu0 %v37
    %82 = vmatpush.msra.mxu0 %v36
    %83 = vmatpush.msra.mxu0 %v35
    %84 = vmatmul.f32.gmra.mxu0 %v45
    %v85 = vpop.f32.mrf.mxu0
    %v86 = vadd.f32 %v41, %v85
    %87 = vmatmul.f32.gmra.mxu0 %v48
    %v88 = vpop.f32.mrf.mxu0
    %v89 = vadd.f32 %v41, %v88
    %90 = vmatmul.f32.gmra.mxu0 %v51
    %v91 = vpop.f32.mrf.mxu0
    %v92 = vadd.f32 %v41, %v91
    %93 = vmatmul.f32.gmra.mxu0 %v54
    %v94 = vpop.f32.mrf.mxu0
    %v95 = vadd.f32 %v41, %v94
    %96 = vmatmul.f32.gmra.mxu0 %v57
    %v97 = vpop.f32.mrf.mxu0
    %v98 = vadd.f32 %v41, %v97
    %99 = vmatmul.f32.gmra.mxu0 %v60
    %v100 = vpop.f32.mrf.mxu0
    %v101 = vadd.f32 %v41, %v100
    %102 = vmatmul.f32.gmra.mxu0 %v63
    %v103 = vpop.f32.mrf.mxu0
    %v104 = vadd.f32 %v41, %v103
    %105 = vmatmul.f32.gmra.mxu0 %v66
    %v106 = vpop.f32.mrf.mxu0
    %v107 = vadd.f32 %v41, %v106
    %108 = vdwg.mxu0
    %vm109 = vcmask 785408
    %110 = vst.msk [vmem:[#allocation2] sm:$0xff] %vm109, %v86
    %111 = vst.msk [vmem:[#allocation2 + $0x8] sm:$0xff] %vm109, %v89
    %112 = vst.msk [vmem:[#allocation2 + $0x10] sm:$0xff] %vm109, %v92
    %113 = vst.msk [vmem:[#allocation2 + $0x18] sm:$0xff] %vm109, %v95
    %114 = vst.msk [vmem:[#allocation2 + $0x20] sm:$0xff] %vm109, %v98
    %115 = vst.msk [vmem:[#allocation2 + $0x28] sm:$0xff] %vm109, %v101
    %116 = vst.msk [vmem:[#allocation2 + $0x30] sm:$0xff] %vm109, %v104
    %117 = vst.msk [vmem:[#allocation2 + $0x38] sm:$0xff] %vm109, %v107
    %v118 = vld [vmem:[%s2] sm:$0xff]
    %v119 = vld [vmem:[%s2 + $0x8] sm:$0xff]
    %v120 = vld [vmem:[%s2 + $0x10] sm:$0xff]
    %v121 = vld [vmem:[%s2 + $0x18] sm:$0xff]
    %v122 = vld [vmem:[%s4] sm:$0x1]
    %v124 = vperm.slane %v122, 0
    %v125 = vld [vmem:[#allocation2] sm:$0xff]
    %v127 = vsel %vm43, 0.0, 0
    %129 = vmatpush.msra.mxu0 0.0
    %130 = vmatpush.msra.mxu0 0.0
    %131 = vmatpush.msra.mxu0 0.0
    %132 = vmatpush.msra.mxu0 0.0
    %133 = vmatpush.msra.mxu0 0.0
    %134 = vmatpush.msra.mxu0 0.0
    %135 = vmatpush.msra.mxu0 0.0
    %136 = vmatpush.msra.mxu0 0.0
    %137 = vmatpush.msra.mxu0 0.0
    %138 = vmatpush.msra.mxu0 0.0
    %139 = vmatpush.msra.mxu0 0.0
    %140 = vmatpush.msra.mxu0 0.0
    %141 = vmatpush.msra.mxu0 %v121
    %142 = vmatpush.msra.mxu0 %v120
    %143 = vmatpush.msra.mxu0 %v119
    %144 = vmatpush.msra.mxu0 %v118
    %145 = vmatmul.f32.gmra.mxu0 %v127
    %v146 = vpop.f32.mrf.mxu0
    %v147 = vadd.f32 0.0, %v146
    %148 = vdwg.mxu0
    %v149 = vadd.f32 %v125, %v147
    %v150 = vxor.u32 %v149, 2147483648
    %v151 = vmul.f32 %v150, 1.442695
    %v152 = vpow.pop %v151
    %v153 = vadd.f32 %v152, 1.0
    %v154 = vrcp.pop %v153
    %v155 = vmul.f32 %v153, %v154
    %v156 = vsub.f32 1.0, %v155
    %v157 = vmul.f32 %v154, %v156
    %v158 = vadd.f32 %v154, %v157
    %vm159 = vweird.f32 %v153
    %vm160 = vweird.f32 %v154
    %vm161 = vmor %vm159, %vm160
    %v162 = vsel %vm161, %v154, %v158
    %v163 = vand.u32 2147483647, %v153
    %vm164 = vcmp.eq.f32.partialorder %v163, 8.507059e+37
    %v165 = vand.u32 %v153, 2147483648
    %v166 = vor.u32 1.1754944e-38, %v165
    %v167 = vsel %vm164, %v166, %v162
    %v168 = vmul.f32 1.0, %v167
    %169 = vrot.lane.b32.xlu0 %v124, 64
    %v170 = vpop.permute.xlu0 %169
    %v172 = vadd.f32 %v147, %v170
    %174 = vrot.lane.b32.xlu0 %v172, 64
    %v175 = vpop.permute.xlu0 %174
    %v177 = vmul.f32 %v168, %v175
    %179 = vrot.lane.b32.xlu0 %v177, 64
    %v180 = vpop.permute.xlu0 %179
    %v182 = vadd.f32 %v125, %v180
    %v183 = vtanh.pop %v182
    %v184 = vsub.f32 1.0, %v168
    %186 = vrot.lane.b32.xlu0 %v183, 96
    %v187 = vpop.permute.xlu0 %186
    %v189 = vmul.f32 %v184, %v187
    %v190 = vmul.f32 %v168, 0.0
    %v191 = vadd.f32 %v189, %v190
    %s192 = scalar_lea.vmem [#allocation2], 8
    %v193 = vld [vmem:[%s192] sm:$0xff]
    %195 = vrot.lane.b32.xlu0 %v191, 96
    %v196 = vpop.permute.xlu0 %195
    %v197 = vsel %vm43, %v196, 0
    %199 = vmatpush.msra.mxu0 0.0
    %200 = vmatpush.msra.mxu0 0.0
    %201 = vmatpush.msra.mxu0 0.0
    %202 = vmatpush.msra.mxu0 0.0
    %203 = vmatpush.msra.mxu0 0.0
    %204 = vmatpush.msra.mxu0 0.0
    %205 = vmatpush.msra.mxu0 0.0
    %206 = vmatpush.msra.mxu0 0.0
    %207 = vmatpush.msra.mxu0 0.0
    %208 = vmatpush.msra.mxu0 0.0
    %209 = vmatpush.msra.mxu0 0.0
    %210 = vmatpush.msra.mxu0 0.0
    %211 = vmatpush.msra.mxu0 %v121
    %212 = vmatpush.msra.mxu0 %v120
    %213 = vmatpush.msra.mxu0 %v119
    %214 = vmatpush.msra.mxu0 %v118
    %215 = vmatmul.f32.gmra.mxu0 %v197
    %v216 = vpop.f32.mrf.mxu0
    %v217 = vadd.f32 0.0, %v216
    %218 = vdwg.mxu0
    %v219 = vadd.f32 %v193, %v217
    %v220 = vxor.u32 %v219, 2147483648
    %v221 = vmul.f32 %v220, 1.442695
    %v222 = vpow.pop %v221
    %v223 = vadd.f32 %v222, 1.0
    %v224 = vrcp.pop %v223
    %v225 = vmul.f32 %v223, %v224
    %v226 = vsub.f32 1.0, %v225
    %v227 = vmul.f32 %v224, %v226
    %v228 = vadd.f32 %v224, %v227
    %vm229 = vweird.f32 %v223
    %vm230 = vweird.f32 %v224
    %vm231 = vmor %vm229, %vm230
    %v232 = vsel %vm231, %v224, %v228
    %v233 = vand.u32 2147483647, %v223
    %vm234 = vcmp.eq.f32.partialorder %v233, 8.507059e+37
    %v235 = vand.u32 %v223, 2147483648
    %v236 = vor.u32 1.1754944e-38, %v235
    %v237 = vsel %vm234, %v236, %v232
    %v238 = vmul.f32 1.0, %v237
    %v239 = vadd.f32 %v217, %v170
    %241 = vrot.lane.b32.xlu0 %v239, 64
    %v242 = vpop.permute.xlu0 %241
    %v244 = vmul.f32 %v238, %v242
    %246 = vrot.lane.b32.xlu0 %v244, 64
    %v247 = vpop.permute.xlu0 %246
    %v249 = vadd.f32 %v193, %v247
    %v250 = vtanh.pop %v249
    %v251 = vsub.f32 1.0, %v238
    %253 = vrot.lane.b32.xlu0 %v250, 96
    %v254 = vpop.permute.xlu0 %253
    %v256 = vmul.f32 %v251, %v254
    %v257 = vmul.f32 %v238, %v191
    %v258 = vadd.f32 %v256, %v257
    %s259 = scalar_lea.vmem [#allocation2], 16
    %v260 = vld [vmem:[%s259] sm:$0xff]
    %262 = vrot.lane.b32.xlu0 %v258, 96
    %v263 = vpop.permute.xlu0 %262
    %v264 = vsel %vm43, %v263, 0
    %266 = vmatpush.msra.mxu0 0.0
    %267 = vmatpush.msra.mxu0 0.0
    %268 = vmatpush.msra.mxu0 0.0
    %269 = vmatpush.msra.mxu0 0.0
    %270 = vmatpush.msra.mxu0 0.0
    %271 = vmatpush.msra.mxu0 0.0
    %272 = vmatpush.msra.mxu0 0.0
    %273 = vmatpush.msra.mxu0 0.0
    %274 = vmatpush.msra.mxu0 0.0
    %275 = vmatpush.msra.mxu0 0.0
    %276 = vmatpush.msra.mxu0 0.0
    %277 = vmatpush.msra.mxu0 0.0
    %278 = vmatpush.msra.mxu0 %v121
    %279 = vmatpush.msra.mxu0 %v120
    %280 = vmatpush.msra.mxu0 %v119
    %281 = vmatpush.msra.mxu0 %v118
    %282 = vmatmul.f32.gmra.mxu0 %v264
    %v283 = vpop.f32.mrf.mxu0
    %v284 = vadd.f32 0.0, %v283
    %285 = vdwg.mxu0
    %v286 = vadd.f32 %v260, %v284
    %v287 = vxor.u32 %v286, 2147483648
    %v288 = vmul.f32 %v287, 1.442695
    %v289 = vpow.pop %v288
    %v290 = vadd.f32 %v289, 1.0
    %v291 = vrcp.pop %v290
    %v292 = vmul.f32 %v290, %v291
    %v293 = vsub.f32 1.0, %v292
    %v294 = vmul.f32 %v291, %v293
    %v295 = vadd.f32 %v291, %v294
    %vm296 = vweird.f32 %v290
    %vm297 = vweird.f32 %v291
    %vm298 = vmor %vm296, %vm297
    %v299 = vsel %vm298, %v291, %v295
    %v300 = vand.u32 2147483647, %v290
    %vm301 = vcmp.eq.f32.partialorder %v300, 8.507059e+37
    %v302 = vand.u32 %v290, 2147483648
    %v303 = vor.u32 1.1754944e-38, %v302
    %v304 = vsel %vm301, %v303, %v299
    %v305 = vmul.f32 1.0, %v304
    %v306 = vadd.f32 %v284, %v170
    %308 = vrot.lane.b32.xlu0 %v306, 64
    %v309 = vpop.permute.xlu0 %308
    %v311 = vmul.f32 %v305, %v309
    %313 = vrot.lane.b32.xlu0 %v311, 64
    %v314 = vpop.permute.xlu0 %313
    %v316 = vadd.f32 %v260, %v314
    %v317 = vtanh.pop %v316
    %v318 = vsub.f32 1.0, %v305
    %320 = vrot.lane.b32.xlu0 %v317, 96
    %v321 = vpop.permute.xlu0 %320
    %v323 = vmul.f32 %v318, %v321
    %v324 = vmul.f32 %v305, %v258
    %v325 = vadd.f32 %v323, %v324
    %s326 = scalar_lea.vmem [#allocation2], 24
    %v327 = vld [vmem:[%s326] sm:$0xff]
    %329 = vrot.lane.b32.xlu0 %v325, 96
    %v330 = vpop.permute.xlu0 %329
    %v331 = vsel %vm43, %v330, 0
    %333 = vmatpush.msra.mxu0 0.0
    %334 = vmatpush.msra.mxu0 0.0
    %335 = vmatpush.msra.mxu0 0.0
    %336 = vmatpush.msra.mxu0 0.0
    %337 = vmatpush.msra.mxu0 0.0
    %338 = vmatpush.msra.mxu0 0.0
    %339 = vmatpush.msra.mxu0 0.0
    %340 = vmatpush.msra.mxu0 0.0
    %341 = vmatpush.msra.mxu0 0.0
    %342 = vmatpush.msra.mxu0 0.0
    %343 = vmatpush.msra.mxu0 0.0
    %344 = vmatpush.msra.mxu0 0.0
    %345 = vmatpush.msra.mxu0 %v121
    %346 = vmatpush.msra.mxu0 %v120
    %347 = vmatpush.msra.mxu0 %v119
    %348 = vmatpush.msra.mxu0 %v118
    %349 = vmatmul.f32.gmra.mxu0 %v331
    %v350 = vpop.f32.mrf.mxu0
    %v351 = vadd.f32 0.0, %v350
    %352 = vdwg.mxu0
    %v353 = vadd.f32 %v327, %v351
    %v354 = vxor.u32 %v353, 2147483648
    %v355 = vmul.f32 %v354, 1.442695
    %v356 = vpow.pop %v355
    %v357 = vadd.f32 %v356, 1.0
    %v358 = vrcp.pop %v357
    %v359 = vmul.f32 %v357, %v358
    %v360 = vsub.f32 1.0, %v359
    %v361 = vmul.f32 %v358, %v360
    %v362 = vadd.f32 %v358, %v361
    %vm363 = vweird.f32 %v357
    %vm364 = vweird.f32 %v358
    %vm365 = vmor %vm363, %vm364
    %v366 = vsel %vm365, %v358, %v362
    %v367 = vand.u32 2147483647, %v357
    %vm368 = vcmp.eq.f32.partialorder %v367, 8.507059e+37
    %v369 = vand.u32 %v357, 2147483648
    %v370 = vor.u32 1.1754944e-38, %v369
    %v371 = vsel %vm368, %v370, %v366
    %v372 = vmul.f32 1.0, %v371
    %v373 = vadd.f32 %v351, %v170
    %375 = vrot.lane.b32.xlu0 %v373, 64
    %v376 = vpop.permute.xlu0 %375
    %v378 = vmul.f32 %v372, %v376
    %380 = vrot.lane.b32.xlu0 %v378, 64
    %v381 = vpop.permute.xlu0 %380
    %v383 = vadd.f32 %v327, %v381
    %v384 = vtanh.pop %v383
    %v385 = vsub.f32 1.0, %v372
    %387 = vrot.lane.b32.xlu0 %v384, 96
    %v388 = vpop.permute.xlu0 %387
    %v390 = vmul.f32 %v385, %v388
    %v391 = vmul.f32 %v372, %v325
    %v392 = vadd.f32 %v390, %v391
    %s393 = scalar_lea.vmem [#allocation2], 32
    %v394 = vld [vmem:[%s393] sm:$0xff]
    %396 = vrot.lane.b32.xlu0 %v392, 96
    %v397 = vpop.permute.xlu0 %396
    %v398 = vsel %vm43, %v397, 0
    %400 = vmatpush.msra.mxu0 0.0
    %401 = vmatpush.msra.mxu0 0.0
    %402 = vmatpush.msra.mxu0 0.0
    %403 = vmatpush.msra.mxu0 0.0
    %404 = vmatpush.msra.mxu0 0.0
    %405 = vmatpush.msra.mxu0 0.0
    %406 = vmatpush.msra.mxu0 0.0
    %407 = vmatpush.msra.mxu0 0.0
    %408 = vmatpush.msra.mxu0 0.0
    %409 = vmatpush.msra.mxu0 0.0
    %410 = vmatpush.msra.mxu0 0.0
    %411 = vmatpush.msra.mxu0 0.0
    %412 = vmatpush.msra.mxu0 %v121
    %413 = vmatpush.msra.mxu0 %v120
    %414 = vmatpush.msra.mxu0 %v119
    %415 = vmatpush.msra.mxu0 %v118
    %416 = vmatmul.f32.gmra.mxu0 %v398
    %v417 = vpop.f32.mrf.mxu0
    %v418 = vadd.f32 0.0, %v417
    %419 = vdwg.mxu0
    %v420 = vadd.f32 %v394, %v418
    %v421 = vxor.u32 %v420, 2147483648
    %v422 = vmul.f32 %v421, 1.442695
    %v423 = vpow.pop %v422
    %v424 = vadd.f32 %v423, 1.0
    %v425 = vrcp.pop %v424
    %v426 = vmul.f32 %v424, %v425
    %v427 = vsub.f32 1.0, %v426
    %v428 = vmul.f32 %v425, %v427
    %v429 = vadd.f32 %v425, %v428
    %vm430 = vweird.f32 %v424
    %vm431 = vweird.f32 %v425
    %vm432 = vmor %vm430, %vm431
    %v433 = vsel %vm432, %v425, %v429
    %v434 = vand.u32 2147483647, %v424
    %vm435 = vcmp.eq.f32.partialorder %v434, 8.507059e+37
    %v436 = vand.u32 %v424, 2147483648
    %v437 = vor.u32 1.1754944e-38, %v436
    %v438 = vsel %vm435, %v437, %v433
    %v439 = vmul.f32 1.0, %v438
    %v440 = vadd.f32 %v418, %v170
    %442 = vrot.lane.b32.xlu0 %v440, 64
    %v443 = vpop.permute.xlu0 %442
    %v445 = vmul.f32 %v439, %v443
    %447 = vrot.lane.b32.xlu0 %v445, 64
    %v448 = vpop.permute.xlu0 %447
    %v450 = vadd.f32 %v394, %v448
    %v451 = vtanh.pop %v450
    %v452 = vsub.f32 1.0, %v439
    %454 = vrot.lane.b32.xlu0 %v451, 96
    %v455 = vpop.permute.xlu0 %454
    %v457 = vmul.f32 %v452, %v455
    %v458 = vmul.f32 %v439, %v392
    %v459 = vadd.f32 %v457, %v458
    %s460 = scalar_lea.vmem [#allocation2], 40
    %v461 = vld [vmem:[%s460] sm:$0xff]
    %463 = vrot.lane.b32.xlu0 %v459, 96
    %v464 = vpop.permute.xlu0 %463
    %v465 = vsel %vm43, %v464, 0
    %467 = vmatpush.msra.mxu0 0.0
    %468 = vmatpush.msra.mxu0 0.0
    %469 = vmatpush.msra.mxu0 0.0
    %470 = vmatpush.msra.mxu0 0.0
    %471 = vmatpush.msra.mxu0 0.0
    %472 = vmatpush.msra.mxu0 0.0
    %473 = vmatpush.msra.mxu0 0.0
    %474 = vmatpush.msra.mxu0 0.0
    %475 = vmatpush.msra.mxu0 0.0
    %476 = vmatpush.msra.mxu0 0.0
    %477 = vmatpush.msra.mxu0 0.0
    %478 = vmatpush.msra.mxu0 0.0
    %479 = vmatpush.msra.mxu0 %v121
    %480 = vmatpush.msra.mxu0 %v120
    %481 = vmatpush.msra.mxu0 %v119
    %482 = vmatpush.msra.mxu0 %v118
    %483 = vmatmul.f32.gmra.mxu0 %v465
    %v484 = vpop.f32.mrf.mxu0
    %v485 = vadd.f32 0.0, %v484
    %486 = vdwg.mxu0
    %v487 = vadd.f32 %v461, %v485
    %v488 = vxor.u32 %v487, 2147483648
    %v489 = vmul.f32 %v488, 1.442695
    %v490 = vpow.pop %v489
    %v491 = vadd.f32 %v490, 1.0
    %v492 = vrcp.pop %v491
    %v493 = vmul.f32 %v491, %v492
    %v494 = vsub.f32 1.0, %v493
    %v495 = vmul.f32 %v492, %v494
    %v496 = vadd.f32 %v492, %v495
    %vm497 = vweird.f32 %v491
    %vm498 = vweird.f32 %v492
    %vm499 = vmor %vm497, %vm498
    %v500 = vsel %vm499, %v492, %v496
    %v501 = vand.u32 2147483647, %v491
    %vm502 = vcmp.eq.f32.partialorder %v501, 8.507059e+37
    %v503 = vand.u32 %v491, 2147483648
    %v504 = vor.u32 1.1754944e-38, %v503
    %v505 = vsel %vm502, %v504, %v500
    %v506 = vmul.f32 1.0, %v505
    %v507 = vadd.f32 %v485, %v170
    %509 = vrot.lane.b32.xlu0 %v507, 64
    %v510 = vpop.permute.xlu0 %509
    %v512 = vmul.f32 %v506, %v510
    %514 = vrot.lane.b32.xlu0 %v512, 64
    %v515 = vpop.permute.xlu0 %514
    %v517 = vadd.f32 %v461, %v515
    %v518 = vtanh.pop %v517
    %v519 = vsub.f32 1.0, %v506
    %521 = vrot.lane.b32.xlu0 %v518, 96
    %v522 = vpop.permute.xlu0 %521
    %v524 = vmul.f32 %v519, %v522
    %v525 = vmul.f32 %v506, %v459
    %v526 = vadd.f32 %v524, %v525
    %s527 = scalar_lea.vmem [#allocation2], 48
    %v528 = vld [vmem:[%s527] sm:$0xff]
    %530 = vrot.lane.b32.xlu0 %v526, 96
    %v531 = vpop.permute.xlu0 %530
    %v532 = vsel %vm43, %v531, 0
    %534 = vmatpush.msra.mxu0 0.0
    %535 = vmatpush.msra.mxu0 0.0
    %536 = vmatpush.msra.mxu0 0.0
    %537 = vmatpush.msra.mxu0 0.0
    %538 = vmatpush.msra.mxu0 0.0
    %539 = vmatpush.msra.mxu0 0.0
    %540 = vmatpush.msra.mxu0 0.0
    %541 = vmatpush.msra.mxu0 0.0
    %542 = vmatpush.msra.mxu0 0.0
    %543 = vmatpush.msra.mxu0 0.0
    %544 = vmatpush.msra.mxu0 0.0
    %545 = vmatpush.msra.mxu0 0.0
    %546 = vmatpush.msra.mxu0 %v121
    %547 = vmatpush.msra.mxu0 %v120
    %548 = vmatpush.msra.mxu0 %v119
    %549 = vmatpush.msra.mxu0 %v118
    %550 = vmatmul.f32.gmra.mxu0 %v532
    %v551 = vpop.f32.mrf.mxu0
    %v552 = vadd.f32 0.0, %v551
    %553 = vdwg.mxu0
    %v554 = vadd.f32 %v528, %v552
    %v555 = vxor.u32 %v554, 2147483648
    %v556 = vmul.f32 %v555, 1.442695
    %v557 = vpow.pop %v556
    %v558 = vadd.f32 %v557, 1.0
    %v559 = vrcp.pop %v558
    %v560 = vmul.f32 %v558, %v559
    %v561 = vsub.f32 1.0, %v560
    %v562 = vmul.f32 %v559, %v561
    %v563 = vadd.f32 %v559, %v562
    %vm564 = vweird.f32 %v558
    %vm565 = vweird.f32 %v559
    %vm566 = vmor %vm564, %vm565
    %v567 = vsel %vm566, %v559, %v563
    %v568 = vand.u32 2147483647, %v558
    %vm569 = vcmp.eq.f32.partialorder %v568, 8.507059e+37
    %v570 = vand.u32 %v558, 2147483648
    %v571 = vor.u32 1.1754944e-38, %v570
    %v572 = vsel %vm569, %v571, %v567
    %v573 = vmul.f32 1.0, %v572
    %v574 = vadd.f32 %v552, %v170
    %576 = vrot.lane.b32.xlu0 %v574, 64
    %v577 = vpop.permute.xlu0 %576
    %v579 = vmul.f32 %v573, %v577
    %581 = vrot.lane.b32.xlu0 %v579, 64
    %v582 = vpop.permute.xlu0 %581
    %v584 = vadd.f32 %v528, %v582
    %v585 = vtanh.pop %v584
    %v586 = vsub.f32 1.0, %v573
    %588 = vrot.lane.b32.xlu0 %v585, 96
    %v589 = vpop.permute.xlu0 %588
    %v591 = vmul.f32 %v586, %v589
    %v592 = vmul.f32 %v573, %v526
    %v593 = vadd.f32 %v591, %v592
    %s594 = scalar_lea.vmem [#allocation2], 56
    %v595 = vld [vmem:[%s594] sm:$0xff]
    %597 = vrot.lane.b32.xlu0 %v593, 96
    %v598 = vpop.permute.xlu0 %597
    %v599 = vsel %vm43, %v598, 0
    %601 = vmatpush.msra.mxu0 0.0
    %602 = vmatpush.msra.mxu0 0.0
    %603 = vmatpush.msra.mxu0 0.0
    %604 = vmatpush.msra.mxu0 0.0
    %605 = vmatpush.msra.mxu0 0.0
    %606 = vmatpush.msra.mxu0 0.0
    %607 = vmatpush.msra.mxu0 0.0
    %608 = vmatpush.msra.mxu0 0.0
    %609 = vmatpush.msra.mxu0 0.0
    %610 = vmatpush.msra.mxu0 0.0
    %611 = vmatpush.msra.mxu0 0.0
    %612 = vmatpush.msra.mxu0 0.0
    %613 = vmatpush.msra.mxu0 %v121
    %614 = vmatpush.msra.mxu0 %v120
    %615 = vmatpush.msra.mxu0 %v119
    %616 = vmatpush.msra.mxu0 %v118
    %617 = vmatmul.f32.gmra.mxu0 %v599
    %v618 = vpop.f32.mrf.mxu0
    %v619 = vadd.f32 0.0, %v618
    %620 = vdwg.mxu0
    %v621 = vadd.f32 %v595, %v619
    %v622 = vxor.u32 %v621, 2147483648
    %v623 = vmul.f32 %v622, 1.442695
    %v624 = vpow.pop %v623
    %v625 = vadd.f32 %v624, 1.0
    %v626 = vrcp.pop %v625
    %v627 = vmul.f32 %v625, %v626
    %v628 = vsub.f32 1.0, %v627
    %v629 = vmul.f32 %v626, %v628
    %v630 = vadd.f32 %v626, %v629
    %vm631 = vweird.f32 %v625
    %vm632 = vweird.f32 %v626
    %vm633 = vmor %vm631, %vm632
    %v634 = vsel %vm633, %v626, %v630
    %v635 = vand.u32 2147483647, %v625
    %vm636 = vcmp.eq.f32.partialorder %v635, 8.507059e+37
    %v637 = vand.u32 %v625, 2147483648
    %v638 = vor.u32 1.1754944e-38, %v637
    %v639 = vsel %vm636, %v638, %v634
    %v640 = vmul.f32 1.0, %v639
    %v641 = vadd.f32 %v619, %v170
    %643 = vrot.lane.b32.xlu0 %v641, 64
    %v644 = vpop.permute.xlu0 %643
    %v646 = vmul.f32 %v640, %v644
    %648 = vrot.lane.b32.xlu0 %v646, 64
    %v649 = vpop.permute.xlu0 %648
    %v651 = vadd.f32 %v595, %v649
    %v652 = vtanh.pop %v651
    %v653 = vsub.f32 1.0, %v640
    %655 = vrot.lane.b32.xlu0 %v652, 96
    %v656 = vpop.permute.xlu0 %655
    %v658 = vmul.f32 %v653, %v656
    %v659 = vmul.f32 %v640, %v593
    %v660 = vadd.f32 %v658, %v659
    %v661 = vld [vmem:[%s5] sm:$0xff]
    %v662 = vld [vmem:[%s5 + $0x8] sm:$0xff]
    %v663 = vld [vmem:[%s5 + $0x10] sm:$0xff]
    %v664 = vld [vmem:[%s5 + $0x18] sm:$0xff]
    %v665 = vld [vmem:[%s6] sm:$0x1]
    %v667 = vperm.slane %v665, 0
    %670 = vrot.lane.b32.xlu0 %v660, 96
    %v671 = vpop.permute.xlu0 %670
    %v672 = vsel %vm43, %v671, 0
    %674 = vmatpush.msra.mxu0 0.0
    %675 = vmatpush.msra.mxu0 0.0
    %676 = vmatpush.msra.mxu0 0.0
    %677 = vmatpush.msra.mxu0 0.0
    %678 = vmatpush.msra.mxu0 0.0
    %679 = vmatpush.msra.mxu0 0.0
    %680 = vmatpush.msra.mxu0 0.0
    %681 = vmatpush.msra.mxu0 0.0
    %682 = vmatpush.msra.mxu0 0.0
    %683 = vmatpush.msra.mxu0 0.0
    %684 = vmatpush.msra.mxu0 0.0
    %685 = vmatpush.msra.mxu0 0.0
    %686 = vmatpush.msra.mxu0 %v664
    %687 = vmatpush.msra.mxu0 %v663
    %688 = vmatpush.msra.mxu0 %v662
    %689 = vmatpush.msra.mxu0 %v661
    %690 = vmatmul.f32.gmra.mxu0 %v672
    %v691 = vpop.f32.mrf.mxu0
    %v692 = vadd.f32 %v667, %v691
    %693 = vdwg.mxu0
    %vm694 = vcmask 64512
    %695 = vst.msk [vmem:[#allocation3] sm:$0xff] %vm694, %v692
    // Predicated region
    $region30: #{gru_forward.1} parent=1 // pred_check
      _
    $region31: #{gru_forward.1} parent=1 // pred_check_branch
      %697 = sbr.rel (0) target = $region33
    $region32: #{gru_forward.1} parent=1 // pred_region
      %699 = vsyncadd [#allocation4], 0
      %s701 = sshll.u32 [#allocation3], 4
      %s702 = int_to_ptr.vmem [resolvable:$true] %s701
      %s703 = sshll.u32 %s7, 4
      %s704 = int_to_ptr.hbm [resolvable:$true] %s703
      %706 = dma.vmem_to_hbm [thread:$0]  %s702, 128, %s704, [#allocation4]
    $region33: #{gru_forward.1} parent=1 // pred_fallthru
      _
    // Predicated region
    $region34: #{gru_forward.1} parent=1 // pred_check
      _
    $region35: #{gru_forward.1} parent=1 // pred_check_branch
      %708 = sbr.rel (0) target = $region37
    $region36: #{gru_forward.1} parent=1 // pred_region
      %710 = dma.done [#allocation4], 128
    $region37: #{gru_forward.1} parent=1 // pred_fallthru
      _
    %711 = vsyncpa [#allocation4], 1

</llo_original>
